<compile_context>
chip_gen: v5e
topology: v5e:2x2
jax: 0.10.0
libtpu: 0.0.40
codegen_flags: <defaults>
</compile_context>

<pallas_src>
import math
from functools import partial

import jax
import jax.numpy as jnp
from jax.experimental import pallas as pl
from jax.experimental.pallas import tpu as pltpu


# -----------------------------------------------------------------------------
# In-kernel helpers
# -----------------------------------------------------------------------------
def _layernorm(x, g, b, eps):
    """Single-pass LayerNorm (sum & sum-of-squares), fp32."""
    m = jnp.mean(x, axis=-1, keepdims=True)
    m2 = jnp.mean(x * x, axis=-1, keepdims=True)
    var = m2 - m * m
    inv = jax.lax.rsqrt(var + eps)
    return (x - m) * inv * g + b


def _gelu_tanh(x):
    """gelu_new / gelu_fast (tanh approximation)."""
    c = 0.7978845608028654  # sqrt(2/pi)
    return 0.5 * x * (1.0 + jnp.tanh(c * (x + 0.044715 * x * x * x)))


# -----------------------------------------------------------------------------
# Fused kernel
# -----------------------------------------------------------------------------
def _content_kernel(x_ref,
                    ln0g_ref, ln0b_ref, ln1g_ref, ln1b_ref, ln2g_ref, ln2b_ref,
                    bw1_ref, bb1_ref, bw2_ref, bb2_ref,
                    fw1_ref, fb1_ref, fw2_ref, fb2_ref,
                    out_ref, u_ref, *, eps, compute_dtype):
    """Grid = (bs, seq_blocks, nv).

    At j == 0 (nv axis): run the full trunk (LN chain + block MLP + final-MLP
    fc1/gelu) for this row tile and stash the result in VMEM scratch `u_ref`.
    Every j: one column tile of the final fc2 -> output slab (rows, d) written
    directly at (b, j, seq_block) of the (bs, nv, s, d) output.
    """
    j = pl.program_id(2)

    @pl.when(j == 0)
    def _trunk():
        x = x_ref[...]                                           # (bm, d) fp32
        h = _layernorm(x, ln0g_ref[...], ln0b_ref[...], eps)     # LN0
        r = h + x                                                # residual add
        h = _layernorm(r, ln1g_ref[...], ln1b_ref[...], eps)     # LN1
        # mixer = Identity
        r = h + r
        h = _layernorm(r, ln2g_ref[...], ln2b_ref[...], eps)     # LN2

        # Block MLP: d -> inner -> d, gelu(tanh).  fp32 accumulation.
        h1 = jnp.dot(h.astype(compute_dtype), bw1_ref[...],
                     preferred_element_type=jnp.float32) + bb1_ref[...]
        h1 = _gelu_tanh(h1)
        h2 = jnp.dot(h1.astype(compute_dtype), bw2_ref[...],
                     preferred_element_type=jnp.float32) + bb2_ref[...]

        # Final MLP fc1 + gelu: d -> inner.
        u = jnp.dot(h2.astype(compute_dtype), fw1_ref[...],
                    preferred_element_type=jnp.float32) + fb1_ref[...]
        u_ref[...] = _gelu_tanh(u).astype(u_ref.dtype)

    # Final fc2, column slice for content vector j: (bm, d).
    y = jnp.dot(u_ref[...], fw2_ref[...],
                preferred_element_type=jnp.float32) + fb2_ref[...]
    out_ref[...] = y.astype(out_ref.dtype)


# -----------------------------------------------------------------------------
# Full module forward
# -----------------------------------------------------------------------------
def backpack_content_forward(params, input_ids, *, num_content_vectors, eps,
                             block_seq=256, compute_dtype=jnp.bfloat16):
    """Forward pass.  Returns (bs, nv, s, d) fp32.

    block_seq: rows of the sequence per grid step (128 is plenty for v5e,
               256-512 for v6e/v7x).  compute_dtype: MXU operand dtype.
    """
    bs, s = input_ids.shape
    d = params["emb"].shape[1]
    inner = params["blk_w1"].shape[1]
    nv = num_content_vectors

    # Glue: embedding gather (plain JAX), residual in fp32.
    emb = params["emb"][input_ids].astype(jnp.float32)           # (bs, s, d)

    # Row tiling over the sequence dim; pad to a multiple of the tile.
    bm = block_seq if s >= block_seq else s
    n_sblk = pl.cdiv(s, bm)
    s_pad = n_sblk * bm
    if s_pad != s:
        emb = jnp.pad(emb, ((0, 0), (0, s_pad - s), (0, 0)))

    cd = compute_dtype
    bw1 = params["blk_w1"].astype(cd)
    bw2 = params["blk_w2"].astype(cd)
    fw1 = params["fin_w1"].astype(cd)
    fw2 = params["fin_w2"].astype(cd)          # (nv, inner, d) column tiles

    vec = lambda shape: pl.BlockSpec(shape, lambda b, si, j: (0, 0))

    out = pl.pallas_call(
        partial(_content_kernel, eps=eps, compute_dtype=cd),
        out_shape=jax.ShapeDtypeStruct((bs, nv, s_pad, d), jnp.float32),
        grid=(bs, n_sblk, nv),
        in_specs=[
            # activations: one (bm, d) row tile, constant across j (stays in VMEM)
            pl.BlockSpec((None, bm, d), lambda b, si, j: (b, si, 0)),
            # LayerNorm params
            vec((1, d)), vec((1, d)),          # ln0
            vec((1, d)), vec((1, d)),          # ln1
            vec((1, d)), vec((1, d)),          # ln2
            # block MLP weights (fully resident, small)
            vec((d, inner)), vec((1, inner)),
            vec((inner, d)), vec((1, d)),
            # final MLP fc1 (resident)
            vec((d, inner)), vec((1, inner)),
            # final MLP fc2: streamed one (inner, d) column tile per j
            pl.BlockSpec((None, inner, d), lambda b, si, j: (j, 0, 0)),
            pl.BlockSpec((None, 1, d), lambda b, si, j: (j, 0, 0)),
        ],
        # output written directly in (bs, nv, s, d) layout -> no XLA transpose
        out_specs=pl.BlockSpec((None, None, bm, d),
                               lambda b, si, j: (b, j, si, 0)),
        scratch_shapes=[pltpu.VMEM((bm, inner), cd)],
        compiler_params=pltpu.CompilerParams(
            dimension_semantics=("parallel", "parallel", "arbitrary"),
            vmem_limit_bytes=64 * 1024 * 1024),
    )(emb,
      params["ln0_g"], params["ln0_b"],
      params["ln1_g"], params["ln1_b"],
      params["ln2_g"], params["ln2_b"],
      bw1, params["blk_b1"], bw2, params["blk_b2"],
      fw1, params["fin_b1"], fw2, params["fin_b2"])

    if s_pad != s:
        out = out[:, :, :s, :]
    return out


# -----------------------------------------------------------------------------
# Deterministic parameter init (matches the PyTorch _init_weights conventions)
# -----------------------------------------------------------------------------
def init_params(key, *, vocab, d, inner, nv, initializer_range=0.02, n_layer=1):
    ks = jax.random.split(key, 6)
    std = initializer_range
    std_fc2 = initializer_range / math.sqrt(2 * n_layer)  # 'fc2.weight' rescale
    f32 = jnp.float32
    return {
        "emb":    jax.random.normal(ks[0], (vocab, d), f32) * std,
        "ln0_g":  jnp.ones((1, d), f32), "ln0_b": jnp.zeros((1, d), f32),
        "ln1_g":  jnp.ones((1, d), f32), "ln1_b": jnp.zeros((1, d), f32),
        "ln2_g":  jnp.ones((1, d), f32), "ln2_b": jnp.zeros((1, d), f32),
        # block Mlp: d -> inner -> d
        "blk_w1": jax.random.normal(ks[1], (d, inner), f32) * std,
        "blk_b1": jnp.zeros((1, inner), f32),
        "blk_w2": jax.random.normal(ks[2], (inner, d), f32) * std_fc2,
        "blk_b2": jnp.zeros((1, d), f32),
        # final Mlp: d -> inner -> nv*d.
        # fc2 stored kernel-friendly as (nv, inner, d): slice j is the weight
        # block producing content vector j (== W[:, j*d:(j+1)*d] of (inner, nv*d)).
        "fin_w1": jax.random.normal(ks[3], (d, inner), f32) * std,
        "fin_b1": jnp.zeros((1, inner), f32),
        "fin_w2": jax.random.normal(ks[4], (nv, inner, d), f32) * std_fc2,
        "fin_b2": jnp.zeros((nv, 1, d), f32),
    }


# -----------------------------------------------------------------------------
# Pure-JAX reference for a correctness check
# -----------------------------------------------------------------------------
def _ref_forward(params, input_ids, *, num_content_vectors, eps):
    def ln(x, g, b):
        mu = x.mean(-1, keepdims=True)
        var = ((x - mu) ** 2).mean(-1, keepdims=True)
        return (x - mu) * jax.lax.rsqrt(var + eps) * g + b

    def mlp_ref(x, w1, b1, w2, b2):
        h = jax.nn.gelu(x @ w1 + b1, approximate=True)
        return h @ w2 + b2

    bs, s = input_ids.shape
    d = params["emb"].shape[1]
    nv = num_content_vectors
    inner = params["blk_w1"].shape[1]
    fin_w2 = params["fin_w2"].transpose(1, 0, 2).reshape(inner, nv * d)
    fin_b2 = params["fin_b2"].reshape(1, nv * d)

    x = params["emb"][input_ids].reshape(bs * s, d).astype(jnp.float32)
    residual = x
    h = ln(x, params["ln0_g"], params["ln0_b"])
    residual = h + residual
    h = ln(residual, params["ln1_g"], params["ln1_b"])
    residual = h + residual
    h = ln(residual, params["ln2_g"], params["ln2_b"])
    h = mlp_ref(h, params["blk_w1"], params["blk_b1"],
                params["blk_w2"], params["blk_b2"])
    h = mlp_ref(h, params["fin_w1"], params["fin_b1"], fin_w2, fin_b2)
    return h.reshape(bs, s, nv, d).transpose(0, 2, 1, 3)


if __name__ == "__main__":
    # Small config: hidden=32, n_inner=4*32=128, num_content_vectors=4,
    # vocab=64, batch=2, seq=8.
    bs, s, d, vocab, nv = 2, 8, 32, 64, 4
    inner = 4 * d
    eps = 1e-5

    key = jax.random.PRNGKey(0)
    k_par, k_ids = jax.random.split(key)
    params = init_params(k_par, vocab=vocab, d=d, inner=inner, nv=nv)
    input_ids = jax.random.randint(k_ids, (bs, s), 0, vocab, dtype=jnp.int32)

    ref = _ref_forward(params, input_ids, num_content_vectors=nv, eps=eps)

    # fp32 MXU operands: tight numerical check against the pure-JAX reference.
    fwd32 = jax.jit(partial(backpack_content_forward, num_content_vectors=nv,
                            eps=eps, compute_dtype=jnp.float32))
    out32 = fwd32(params, input_ids)
    jax.block_until_ready(out32)
    assert out32.shape == (bs, nv, s, d), out32.shape
    assert jnp.allclose(out32, ref, atol=1e-5, rtol=1e-3), "fp32 mismatch"

    # Default bf16 matmul operands (fp32 accumulation): looser check.
    fwd16 = jax.jit(partial(backpack_content_forward, num_content_vectors=nv,
                            eps=eps))
    out16 = fwd16(params, input_ids)
    jax.block_until_ready(out16)
    assert out16.shape == (bs, nv, s, d), out16.shape
    assert jnp.allclose(out16, ref, atol=5e-4, rtol=5e-2), "bf16 mismatch"

    print("KERNEL_OK")
</pallas_src>

<mosaic_0001>
module attributes {stable_mosaic.version = 11 : i64} {
  func.func @_content_kernel(%arg0: i32, %arg1: i32, %arg2: i32, %arg3: memref<1x8x32xf32, #tpu.memory_space<vmem>>, %arg4: memref<1x32xf32, #tpu.memory_space<vmem>>, %arg5: memref<1x32xf32, #tpu.memory_space<vmem>>, %arg6: memref<1x32xf32, #tpu.memory_space<vmem>>, %arg7: memref<1x32xf32, #tpu.memory_space<vmem>>, %arg8: memref<1x32xf32, #tpu.memory_space<vmem>>, %arg9: memref<1x32xf32, #tpu.memory_space<vmem>>, %arg10: memref<32x128xf32, #tpu.memory_space<vmem>>, %arg11: memref<1x128xf32, #tpu.memory_space<vmem>>, %arg12: memref<128x32xf32, #tpu.memory_space<vmem>>, %arg13: memref<1x32xf32, #tpu.memory_space<vmem>>, %arg14: memref<32x128xf32, #tpu.memory_space<vmem>>, %arg15: memref<1x128xf32, #tpu.memory_space<vmem>>, %arg16: memref<1x128x32xf32, #tpu.memory_space<vmem>>, %arg17: memref<1x1x32xf32, #tpu.memory_space<vmem>>, %arg18: memref<1x1x8x32xf32, #tpu.memory_space<vmem>>, %arg19: memref<8x128xf32, #tpu.memory_space<vmem>>) attributes {dimension_semantics = [#tpu.dimension_semantics<parallel>, #tpu.dimension_semantics<parallel>, #tpu.dimension_semantics<arbitrary>], iteration_bounds = array<i64: 2, 1, 4>, scalar_prefetch = 0 : i64, scratch_operands = 1 : i64, tpu.core_type = #tpu.core_type<tc>, window_params = [{transform_indices = @transform_0, window_bounds = array<i64: 1, 8, 32>}, {pipeline_mode = #tpu.pipeline_mode<synchronous>, transform_indices = @transform_1, window_bounds = array<i64: 1, 32>}, {pipeline_mode = #tpu.pipeline_mode<synchronous>, transform_indices = @transform_2, window_bounds = array<i64: 1, 32>}, {pipeline_mode = #tpu.pipeline_mode<synchronous>, transform_indices = @transform_3, window_bounds = array<i64: 1, 32>}, {pipeline_mode = #tpu.pipeline_mode<synchronous>, transform_indices = @transform_4, window_bounds = array<i64: 1, 32>}, {pipeline_mode = #tpu.pipeline_mode<synchronous>, transform_indices = @transform_5, window_bounds = array<i64: 1, 32>}, {pipeline_mode = #tpu.pipeline_mode<synchronous>, transform_indices = @transform_6, window_bounds = array<i64: 1, 32>}, {pipeline_mode = #tpu.pipeline_mode<synchronous>, transform_indices = @transform_7, window_bounds = array<i64: 32, 128>}, {pipeline_mode = #tpu.pipeline_mode<synchronous>, transform_indices = @transform_8, window_bounds = array<i64: 1, 128>}, {pipeline_mode = #tpu.pipeline_mode<synchronous>, transform_indices = @transform_9, window_bounds = array<i64: 128, 32>}, {pipeline_mode = #tpu.pipeline_mode<synchronous>, transform_indices = @transform_10, window_bounds = array<i64: 1, 32>}, {pipeline_mode = #tpu.pipeline_mode<synchronous>, transform_indices = @transform_11, window_bounds = array<i64: 32, 128>}, {pipeline_mode = #tpu.pipeline_mode<synchronous>, transform_indices = @transform_12, window_bounds = array<i64: 1, 128>}, {transform_indices = @transform_13, window_bounds = array<i64: 1, 128, 32>}, {transform_indices = @transform_14, window_bounds = array<i64: 1, 1, 32>}, {transform_indices = @transform_15, window_bounds = array<i64: 1, 1, 8, 32>}]} {
    %c0_i32 = arith.constant 0 : i32
    %0 = arith.cmpi eq, %arg2, %c0_i32 : i32
    %1 = arith.extui %0 : i1 to i32
    %c0_i32_0 = arith.constant 0 : i32
    %2 = arith.cmpi ne, %1, %c0_i32_0 : i32
    scf.if %2 {
      %c0_12 = arith.constant 0 : index
      %c0_13 = arith.constant 0 : index
      %c0_14 = arith.constant 0 : index
      %14 = vector.load %arg3[%c0_12, %c0_13, %c0_14] : memref<1x8x32xf32, #tpu.memory_space<vmem>>, vector<1x8x32xf32>
      %15 = vector.shape_cast %14 : vector<1x8x32xf32> to vector<8x32xf32>
      %c0_15 = arith.constant 0 : index
      %c0_16 = arith.constant 0 : index
      %16 = vector.load %arg4[%c0_15, %c0_16] : memref<1x32xf32, #tpu.memory_space<vmem>>, vector<1x32xf32>
      %c0_17 = arith.constant 0 : index
      %c0_18 = arith.constant 0 : index
      %17 = vector.load %arg5[%c0_17, %c0_18] : memref<1x32xf32, #tpu.memory_space<vmem>>, vector<1x32xf32>
      %cst_19 = arith.constant dense<0.000000e+00> : vector<8xf32>
      %18 = vector.multi_reduction <add>, %15, %cst_19 [1] : vector<8x32xf32> to vector<8xf32>
      %19 = vector.shape_cast %18 : vector<8xf32> to vector<8x1xf32>
      %cst_20 = arith.constant 3.200000e+01 : f32
      %20 = vector.broadcast %cst_20 : f32 to vector<8x1xf32>
      %21 = arith.divf %19, %20 : vector<8x1xf32>
      %22 = arith.mulf %15, %15 : vector<8x32xf32>
      %cst_21 = arith.constant dense<0.000000e+00> : vector<8xf32>
      %23 = vector.multi_reduction <add>, %22, %cst_21 [1] : vector<8x32xf32> to vector<8xf32>
      %24 = vector.shape_cast %23 : vector<8xf32> to vector<8x1xf32>
      %cst_22 = arith.constant 3.200000e+01 : f32
      %25 = vector.broadcast %cst_22 : f32 to vector<8x1xf32>
      %26 = arith.divf %24, %25 : vector<8x1xf32>
      %27 = arith.mulf %21, %21 : vector<8x1xf32>
      %28 = arith.subf %26, %27 : vector<8x1xf32>
      %cst_23 = arith.constant 9.99999974E-6 : f32
      %29 = vector.broadcast %cst_23 : f32 to vector<8x1xf32>
      %30 = arith.addf %28, %29 : vector<8x1xf32>
      %31 = math.rsqrt %30 : vector<8x1xf32>
      %32 = vector.broadcast %21 : vector<8x1xf32> to vector<8x32xf32>
      %33 = arith.subf %15, %32 : vector<8x32xf32>
      %34 = vector.broadcast %31 : vector<8x1xf32> to vector<8x32xf32>
      %35 = arith.mulf %33, %34 : vector<8x32xf32>
      %36 = vector.broadcast %16 : vector<1x32xf32> to vector<8x32xf32>
      %37 = arith.mulf %35, %36 : vector<8x32xf32>
      %38 = vector.broadcast %17 : vector<1x32xf32> to vector<8x32xf32>
      %39 = arith.addf %37, %38 : vector<8x32xf32>
      %40 = arith.addf %39, %15 : vector<8x32xf32>
      %c0_24 = arith.constant 0 : index
      %c0_25 = arith.constant 0 : index
      %41 = vector.load %arg6[%c0_24, %c0_25] : memref<1x32xf32, #tpu.memory_space<vmem>>, vector<1x32xf32>
      %c0_26 = arith.constant 0 : index
      %c0_27 = arith.constant 0 : index
      %42 = vector.load %arg7[%c0_26, %c0_27] : memref<1x32xf32, #tpu.memory_space<vmem>>, vector<1x32xf32>
      %cst_28 = arith.constant dense<0.000000e+00> : vector<8xf32>
      %43 = vector.multi_reduction <add>, %40, %cst_28 [1] : vector<8x32xf32> to vector<8xf32>
      %44 = vector.shape_cast %43 : vector<8xf32> to vector<8x1xf32>
      %cst_29 = arith.constant 3.200000e+01 : f32
      %45 = vector.broadcast %cst_29 : f32 to vector<8x1xf32>
      %46 = arith.divf %44, %45 : vector<8x1xf32>
      %47 = arith.mulf %40, %40 : vector<8x32xf32>
      %cst_30 = arith.constant dense<0.000000e+00> : vector<8xf32>
      %48 = vector.multi_reduction <add>, %47, %cst_30 [1] : vector<8x32xf32> to vector<8xf32>
      %49 = vector.shape_cast %48 : vector<8xf32> to vector<8x1xf32>
      %cst_31 = arith.constant 3.200000e+01 : f32
      %50 = vector.broadcast %cst_31 : f32 to vector<8x1xf32>
      %51 = arith.divf %49, %50 : vector<8x1xf32>
      %52 = arith.mulf %46, %46 : vector<8x1xf32>
      %53 = arith.subf %51, %52 : vector<8x1xf32>
      %cst_32 = arith.constant 9.99999974E-6 : f32
      %54 = vector.broadcast %cst_32 : f32 to vector<8x1xf32>
      %55 = arith.addf %53, %54 : vector<8x1xf32>
      %56 = math.rsqrt %55 : vector<8x1xf32>
      %57 = vector.broadcast %46 : vector<8x1xf32> to vector<8x32xf32>
      %58 = arith.subf %40, %57 : vector<8x32xf32>
      %59 = vector.broadcast %56 : vector<8x1xf32> to vector<8x32xf32>
      %60 = arith.mulf %58, %59 : vector<8x32xf32>
      %61 = vector.broadcast %41 : vector<1x32xf32> to vector<8x32xf32>
      %62 = arith.mulf %60, %61 : vector<8x32xf32>
      %63 = vector.broadcast %42 : vector<1x32xf32> to vector<8x32xf32>
      %64 = arith.addf %62, %63 : vector<8x32xf32>
      %65 = arith.addf %64, %40 : vector<8x32xf32>
      %c0_33 = arith.constant 0 : index
      %c0_34 = arith.constant 0 : index
      %66 = vector.load %arg8[%c0_33, %c0_34] : memref<1x32xf32, #tpu.memory_space<vmem>>, vector<1x32xf32>
      %c0_35 = arith.constant 0 : index
      %c0_36 = arith.constant 0 : index
      %67 = vector.load %arg9[%c0_35, %c0_36] : memref<1x32xf32, #tpu.memory_space<vmem>>, vector<1x32xf32>
      %cst_37 = arith.constant dense<0.000000e+00> : vector<8xf32>
      %68 = vector.multi_reduction <add>, %65, %cst_37 [1] : vector<8x32xf32> to vector<8xf32>
      %69 = vector.shape_cast %68 : vector<8xf32> to vector<8x1xf32>
      %cst_38 = arith.constant 3.200000e+01 : f32
      %70 = vector.broadcast %cst_38 : f32 to vector<8x1xf32>
      %71 = arith.divf %69, %70 : vector<8x1xf32>
      %72 = arith.mulf %65, %65 : vector<8x32xf32>
      %cst_39 = arith.constant dense<0.000000e+00> : vector<8xf32>
      %73 = vector.multi_reduction <add>, %72, %cst_39 [1] : vector<8x32xf32> to vector<8xf32>
      %74 = vector.shape_cast %73 : vector<8xf32> to vector<8x1xf32>
      %cst_40 = arith.constant 3.200000e+01 : f32
      %75 = vector.broadcast %cst_40 : f32 to vector<8x1xf32>
      %76 = arith.divf %74, %75 : vector<8x1xf32>
      %77 = arith.mulf %71, %71 : vector<8x1xf32>
      %78 = arith.subf %76, %77 : vector<8x1xf32>
      %cst_41 = arith.constant 9.99999974E-6 : f32
      %79 = vector.broadcast %cst_41 : f32 to vector<8x1xf32>
      %80 = arith.addf %78, %79 : vector<8x1xf32>
      %81 = math.rsqrt %80 : vector<8x1xf32>
      %82 = vector.broadcast %71 : vector<8x1xf32> to vector<8x32xf32>
      %83 = arith.subf %65, %82 : vector<8x32xf32>
      %84 = vector.broadcast %81 : vector<8x1xf32> to vector<8x32xf32>
      %85 = arith.mulf %83, %84 : vector<8x32xf32>
      %86 = vector.broadcast %66 : vector<1x32xf32> to vector<8x32xf32>
      %87 = arith.mulf %85, %86 : vector<8x32xf32>
      %88 = vector.broadcast %67 : vector<1x32xf32> to vector<8x32xf32>
      %89 = arith.addf %87, %88 : vector<8x32xf32>
      %c0_42 = arith.constant 0 : index
      %c0_43 = arith.constant 0 : index
      %90 = vector.load %arg10[%c0_42, %c0_43] : memref<32x128xf32, #tpu.memory_space<vmem>>, vector<32x128xf32>
      %cst_44 = arith.constant dense<0.000000e+00> : vector<8x128xf32>
      %91 = tpu.matmul %89, %90, %cst_44 {dimension_numbers = #tpu.dot_dimension_numbers<[1], [0], [0], [1], [0, 0, 1, 1], [], []>} : vector<8x32xf32>, vector<32x128xf32>, vector<8x128xf32> -> vector<8x128xf32>
      %c0_45 = arith.constant 0 : index
      %c0_46 = arith.constant 0 : index
      %92 = vector.load %arg11[%c0_45, %c0_46] : memref<1x128xf32, #tpu.memory_space<vmem>>, vector<1x128xf32>
      %93 = vector.broadcast %92 : vector<1x128xf32> to vector<8x128xf32>
      %94 = arith.addf %91, %93 : vector<8x128xf32>
      %cst_47 = arith.constant 5.000000e-01 : f32
      %95 = vector.broadcast %cst_47 : f32 to vector<8x128xf32>
      %96 = arith.mulf %95, %94 : vector<8x128xf32>
      %cst_48 = arith.constant 4.471500e-02 : f32
      %97 = vector.broadcast %cst_48 : f32 to vector<8x128xf32>
      %98 = arith.mulf %97, %94 : vector<8x128xf32>
      %99 = arith.mulf %98, %94 : vector<8x128xf32>
      %100 = arith.mulf %99, %94 : vector<8x128xf32>
      %101 = arith.addf %94, %100 : vector<8x128xf32>
      %cst_49 = arith.constant 0.797884583 : f32
      %102 = vector.broadcast %cst_49 : f32 to vector<8x128xf32>
      %103 = arith.mulf %102, %101 : vector<8x128xf32>
      %104 = math.tanh %103 : vector<8x128xf32>
      %cst_50 = arith.constant 1.000000e+00 : f32
      %105 = vector.broadcast %cst_50 : f32 to vector<8x128xf32>
      %106 = arith.addf %105, %104 : vector<8x128xf32>
      %107 = arith.mulf %96, %106 : vector<8x128xf32>
      %c0_51 = arith.constant 0 : index
      %c0_52 = arith.constant 0 : index
      %108 = vector.load %arg12[%c0_51, %c0_52] : memref<128x32xf32, #tpu.memory_space<vmem>>, vector<128x32xf32>
      %cst_53 = arith.constant dense<0.000000e+00> : vector<8x32xf32>
      %109 = tpu.matmul %107, %108, %cst_53 {dimension_numbers = #tpu.dot_dimension_numbers<[1], [0], [0], [1], [0, 0, 1, 1], [], []>} : vector<8x128xf32>, vector<128x32xf32>, vector<8x32xf32> -> vector<8x32xf32>
      %c0_54 = arith.constant 0 : index
      %c0_55 = arith.constant 0 : index
      %110 = vector.load %arg13[%c0_54, %c0_55] : memref<1x32xf32, #tpu.memory_space<vmem>>, vector<1x32xf32>
      %111 = vector.broadcast %110 : vector<1x32xf32> to vector<8x32xf32>
      %112 = arith.addf %109, %111 : vector<8x32xf32>
      %c0_56 = arith.constant 0 : index
      %c0_57 = arith.constant 0 : index
      %113 = vector.load %arg14[%c0_56, %c0_57] : memref<32x128xf32, #tpu.memory_space<vmem>>, vector<32x128xf32>
      %cst_58 = arith.constant dense<0.000000e+00> : vector<8x128xf32>
      %114 = tpu.matmul %112, %113, %cst_58 {dimension_numbers = #tpu.dot_dimension_numbers<[1], [0], [0], [1], [0, 0, 1, 1], [], []>} : vector<8x32xf32>, vector<32x128xf32>, vector<8x128xf32> -> vector<8x128xf32>
      %c0_59 = arith.constant 0 : index
      %c0_60 = arith.constant 0 : index
      %115 = vector.load %arg15[%c0_59, %c0_60] : memref<1x128xf32, #tpu.memory_space<vmem>>, vector<1x128xf32>
      %116 = vector.broadcast %115 : vector<1x128xf32> to vector<8x128xf32>
      %117 = arith.addf %114, %116 : vector<8x128xf32>
      %cst_61 = arith.constant 5.000000e-01 : f32
      %118 = vector.broadcast %cst_61 : f32 to vector<8x128xf32>
      %119 = arith.mulf %118, %117 : vector<8x128xf32>
      %cst_62 = arith.constant 4.471500e-02 : f32
      %120 = vector.broadcast %cst_62 : f32 to vector<8x128xf32>
      %121 = arith.mulf %120, %117 : vector<8x128xf32>
      %122 = arith.mulf %121, %117 : vector<8x128xf32>
      %123 = arith.mulf %122, %117 : vector<8x128xf32>
      %124 = arith.addf %117, %123 : vector<8x128xf32>
      %cst_63 = arith.constant 0.797884583 : f32
      %125 = vector.broadcast %cst_63 : f32 to vector<8x128xf32>
      %126 = arith.mulf %125, %124 : vector<8x128xf32>
      %127 = math.tanh %126 : vector<8x128xf32>
      %cst_64 = arith.constant 1.000000e+00 : f32
      %128 = vector.broadcast %cst_64 : f32 to vector<8x128xf32>
      %129 = arith.addf %128, %127 : vector<8x128xf32>
      %130 = arith.mulf %119, %129 : vector<8x128xf32>
      %c0_65 = arith.constant 0 : index
      %c0_66 = arith.constant 0 : index
      %131 = vector.load %arg19[%c0_65, %c0_66] : memref<8x128xf32, #tpu.memory_space<vmem>>, vector<8x128xf32>
      tpu.vector_store %arg19[%c0_65, %c0_66], %130 {strides = array<i32>} : memref<8x128xf32, #tpu.memory_space<vmem>>, vector<8x128xf32>,
    } else {
    }
    %c0 = arith.constant 0 : index
    %c0_1 = arith.constant 0 : index
    %3 = vector.load %arg19[%c0, %c0_1] : memref<8x128xf32, #tpu.memory_space<vmem>>, vector<8x128xf32>
    %c0_2 = arith.constant 0 : index
    %c0_3 = arith.constant 0 : index
    %c0_4 = arith.constant 0 : index
    %4 = vector.load %arg16[%c0_2, %c0_3, %c0_4] : memref<1x128x32xf32, #tpu.memory_space<vmem>>, vector<1x128x32xf32>
    %5 = vector.shape_cast %4 : vector<1x128x32xf32> to vector<128x32xf32>
    %cst = arith.constant dense<0.000000e+00> : vector<8x32xf32>
    %6 = tpu.matmul %3, %5, %cst {dimension_numbers = #tpu.dot_dimension_numbers<[1], [0], [0], [1], [0, 0, 1, 1], [], []>} : vector<8x128xf32>, vector<128x32xf32>, vector<8x32xf32> -> vector<8x32xf32>
    %c0_5 = arith.constant 0 : index
    %c0_6 = arith.constant 0 : index
    %c0_7 = arith.constant 0 : index
    %7 = vector.load %arg17[%c0_5, %c0_6, %c0_7] : memref<1x1x32xf32, #tpu.memory_space<vmem>>, vector<1x1x32xf32>
    %8 = vector.shape_cast %7 : vector<1x1x32xf32> to vector<1x32xf32>
    %9 = vector.broadcast %8 : vector<1x32xf32> to vector<8x32xf32>
    %10 = arith.addf %6, %9 : vector<8x32xf32>
    %c0_8 = arith.constant 0 : index
    %c0_9 = arith.constant 0 : index
    %c0_10 = arith.constant 0 : index
    %c0_11 = arith.constant 0 : index
    %11 = vector.load %arg18[%c0_8, %c0_9, %c0_10, %c0_11] : memref<1x1x8x32xf32, #tpu.memory_space<vmem>>, vector<1x1x8x32xf32>
    %12 = vector.shape_cast %11 : vector<1x1x8x32xf32> to vector<8x32xf32>
    %13 = vector.shape_cast %10 : vector<8x32xf32> to vector<1x1x8x32xf32>
    tpu.vector_store %arg18[%c0_8, %c0_9, %c0_10, %c0_11], %13 {strides = array<i32>} : memref<1x1x8x32xf32, #tpu.memory_space<vmem>>, vector<1x1x8x32xf32>,
    return
  }
  func.func @transform_0(%arg0: i32, %arg1: i32, %arg2: i32) -> (i32, i32, i32) {
    %c0_i32 = arith.constant 0 : i32
    %c0_i32_0 = arith.constant 0 : i32
    return %arg0, %arg1, %c0_i32 : i32, i32, i32
  }
  func.func @transform_1(%arg0: i32, %arg1: i32, %arg2: i32) -> (i32, i32) {
    %c0_i32 = arith.constant 0 : i32
    %c0_i32_0 = arith.constant 0 : i32
    %c0_i32_1 = arith.constant 0 : i32
    return %c0_i32, %c0_i32_0 : i32, i32
  }
  func.func @transform_2(%arg0: i32, %arg1: i32, %arg2: i32) -> (i32, i32) {
    %c0_i32 = arith.constant 0 : i32
    %c0_i32_0 = arith.constant 0 : i32
    %c0_i32_1 = arith.constant 0 : i32
    return %c0_i32, %c0_i32_0 : i32, i32
  }
  func.func @transform_3(%arg0: i32, %arg1: i32, %arg2: i32) -> (i32, i32) {
    %c0_i32 = arith.constant 0 : i32
    %c0_i32_0 = arith.constant 0 : i32
    %c0_i32_1 = arith.constant 0 : i32
    return %c0_i32, %c0_i32_0 : i32, i32
  }
  func.func @transform_4(%arg0: i32, %arg1: i32, %arg2: i32) -> (i32, i32) {
    %c0_i32 = arith.constant 0 : i32
    %c0_i32_0 = arith.constant 0 : i32
    %c0_i32_1 = arith.constant 0 : i32
    return %c0_i32, %c0_i32_0 : i32, i32
  }
  func.func @transform_5(%arg0: i32, %arg1: i32, %arg2: i32) -> (i32, i32) {
    %c0_i32 = arith.constant 0 : i32
    %c0_i32_0 = arith.constant 0 : i32
    %c0_i32_1 = arith.constant 0 : i32
    return %c0_i32, %c0_i32_0 : i32, i32
  }
  func.func @transform_6(%arg0: i32, %arg1: i32, %arg2: i32) -> (i32, i32) {
    %c0_i32 = arith.constant 0 : i32
    %c0_i32_0 = arith.constant 0 : i32
    %c0_i32_1 = arith.constant 0 : i32
    return %c0_i32, %c0_i32_0 : i32, i32
  }
  func.func @transform_7(%arg0: i32, %arg1: i32, %arg2: i32) -> (i32, i32) {
    %c0_i32 = arith.constant 0 : i32
    %c0_i32_0 = arith.constant 0 : i32
    %c0_i32_1 = arith.constant 0 : i32
    return %c0_i32, %c0_i32_0 : i32, i32
  }
  func.func @transform_8(%arg0: i32, %arg1: i32, %arg2: i32) -> (i32, i32) {
    %c0_i32 = arith.constant 0 : i32
    %c0_i32_0 = arith.constant 0 : i32
    %c0_i32_1 = arith.constant 0 : i32
    return %c0_i32, %c0_i32_0 : i32, i32
  }
  func.func @transform_9(%arg0: i32, %arg1: i32, %arg2: i32) -> (i32, i32) {
    %c0_i32 = arith.constant 0 : i32
    %c0_i32_0 = arith.constant 0 : i32
    %c0_i32_1 = arith.constant 0 : i32
    return %c0_i32, %c0_i32_0 : i32, i32
  }
  func.func @transform_10(%arg0: i32, %arg1: i32, %arg2: i32) -> (i32, i32) {
    %c0_i32 = arith.constant 0 : i32
    %c0_i32_0 = arith.constant 0 : i32
    %c0_i32_1 = arith.constant 0 : i32
    return %c0_i32, %c0_i32_0 : i32, i32
  }
  func.func @transform_11(%arg0: i32, %arg1: i32, %arg2: i32) -> (i32, i32) {
    %c0_i32 = arith.constant 0 : i32
    %c0_i32_0 = arith.constant 0 : i32
    %c0_i32_1 = arith.constant 0 : i32
    return %c0_i32, %c0_i32_0 : i32, i32
  }
  func.func @transform_12(%arg0: i32, %arg1: i32, %arg2: i32) -> (i32, i32) {
    %c0_i32 = arith.constant 0 : i32
    %c0_i32_0 = arith.constant 0 : i32
    %c0_i32_1 = arith.constant 0 : i32
    return %c0_i32, %c0_i32_0 : i32, i32
  }
  func.func @transform_13(%arg0: i32, %arg1: i32, %arg2: i32) -> (i32, i32, i32) {
    %c0_i32 = arith.constant 0 : i32
    %c0_i32_0 = arith.constant 0 : i32
    %c0_i32_1 = arith.constant 0 : i32
    return %arg2, %c0_i32, %c0_i32_0 : i32, i32, i32
  }
  func.func @transform_14(%arg0: i32, %arg1: i32, %arg2: i32) -> (i32, i32, i32) {
    %c0_i32 = arith.constant 0 : i32
    %c0_i32_0 = arith.constant 0 : i32
    %c0_i32_1 = arith.constant 0 : i32
    return %arg2, %c0_i32, %c0_i32_0 : i32, i32, i32
  }
  func.func @transform_15(%arg0: i32, %arg1: i32, %arg2: i32) -> (i32, i32, i32, i32) {
    %c0_i32 = arith.constant 0 : i32
    %c0_i32_0 = arith.constant 0 : i32
    return %arg0, %arg2, %arg1, %c0_i32 : i32, i32, i32, i32
  }
}

</mosaic_0001>

<llo_original>
// kernel: backpack_content_forward.1
$region0: #{backpack_content_forward.1}
  #allocation0 [shape = 'u32[]', space=smem, size = 0x4, offset = 0x4, fixed_abs, tag = 'smem constant byte address 0x4 - core index']
  #allocation1 [shape = 'u32[72,128]{1,0:T(1,128)}', space=vmem, size = 0x9000, scoped, tag = 'internal scratch']
  #allocation2 [shape = 'f32[8,128]{1,0:T(8,128)}', space=vmem, size = 0x1000, scoped, tag = 'scratch operand']
  %s0 = inlined_call_operand.vmem [shape: f32[2,8,32], index: 0, kind: input, shape index: {}]
  %s1 = inlined_call_operand.vmem [shape: f32[1,32], index: 1, kind: input, shape index: {}]
  %s2 = inlined_call_operand.vmem [shape: f32[1,32], index: 2, kind: input, shape index: {}]
  %s3 = inlined_call_operand.vmem [shape: f32[1,32], index: 3, kind: input, shape index: {}]
  %s4 = inlined_call_operand.vmem [shape: f32[1,32], index: 4, kind: input, shape index: {}]
  %s5 = inlined_call_operand.vmem [shape: f32[1,32], index: 5, kind: input, shape index: {}]
  %s6 = inlined_call_operand.vmem [shape: f32[1,32], index: 6, kind: input, shape index: {}]
  %s7 = inlined_call_operand.vmem [shape: f32[32,128], index: 7, kind: input, shape index: {}]
  %s8 = inlined_call_operand.vmem [shape: f32[1,128], index: 8, kind: input, shape index: {}]
  %s9 = inlined_call_operand.vmem [shape: f32[128,32], index: 9, kind: input, shape index: {}]
  %s10 = inlined_call_operand.vmem [shape: f32[1,32], index: 10, kind: input, shape index: {}]
  %s11 = inlined_call_operand.vmem [shape: f32[32,128], index: 11, kind: input, shape index: {}]
  %s12 = inlined_call_operand.vmem [shape: f32[1,128], index: 12, kind: input, shape index: {}]
  %s13 = inlined_call_operand.vmem [shape: f32[4,128,32], index: 13, kind: input, shape index: {}]
  %s14 = inlined_call_operand.vmem [shape: f32[4,1,32], index: 14, kind: input, shape index: {}]
  %s15 = inlined_call_operand.hbm [shape: f32[2,4,8,32], index: 15, kind: output, shape index: {}]
  %s16 = sld [smem:[#allocation0]]
  $region97: #{backpack_content_forward.1} parent=0
    _
  %s18 = ssub.s32 1, %s16
  %s19 = scalar_select 0, %s18, %s16
  $region1: #{backpack_content_forward.1} parent=0
    #allocation3 [shape = 'u8[8192]{0}', space=vmem, size = 0x2000, scoped, tag = 'output window, operand 0']
    #allocation4 [shape = 's32[2]{0}', space=sflag, size = 0x8, scoped, tag = 'scoped memory for backpack_content_forward.1']
    %20 = vsyncpa [#allocation4], 0
    %s21 = scalar_lea.sflag [#allocation4], 1
    %22 = vsyncpa %s21, 0
    loop: start=0, step=1, limit=10
    $region2: #{backpack_content_forward.1} parent=1 // loop_pre_header
      _
    $region3: #{backpack_content_forward.1} parent=1 // loop_header
      %s24 = sphi 0, %s28
      %p25 = scmp.ge.s32.totalorder %s24, 10
      %s31 = sphi 0, %s50
      %s32 = sphi 0, %s46
      %s33 = sphi 0, %s42
      %s34 = sphi 0, %s31
      %s35 = sphi 0, %s32
      %s36 = sphi 0, %s33
      %s37 = sphi 0, %s34
      %s38 = sphi 0, %s35
      %s39 = sphi 0, %s36
      %s55 = sphi 0, %s57
      %s58 = sphi 0, %s55
      %s59 = sphi 0, %s58
      %s75 = sphi 0, %s59
      %s79 = sphi 0, %s79
      %s81 = sphi 0, %s79
      %s82 = sphi 0, %s81
      %s96 = sphi 0, %s82
      %s100 = sphi 0, %s100
      %s102 = sphi 0, %s100
      %s103 = sphi 0, %s102
      %s117 = sphi 0, %s103
      %s121 = sphi 0, %s121
      %s123 = sphi 0, %s121
      %s124 = sphi 0, %s123
      %s138 = sphi 0, %s124
      %s142 = sphi 0, %s142
      %s144 = sphi 0, %s142
      %s145 = sphi 0, %s144
      %s159 = sphi 0, %s145
      %s163 = sphi 0, %s163
      %s165 = sphi 0, %s163
      %s166 = sphi 0, %s165
      %s180 = sphi 0, %s166
      %s184 = sphi 0, %s184
      %s186 = sphi 0, %s184
      %s187 = sphi 0, %s186
      %s201 = sphi 0, %s187
      %s205 = sphi 0, %s205
      %s207 = sphi 0, %s205
      %s208 = sphi 0, %s207
      %s222 = sphi 0, %s208
      %s226 = sphi 0, %s226
      %s228 = sphi 0, %s226
      %s229 = sphi 0, %s228
      %s243 = sphi 0, %s229
      %s247 = sphi 0, %s247
      %s249 = sphi 0, %s247
      %s250 = sphi 0, %s249
      %s264 = sphi 0, %s250
      %s268 = sphi 0, %s268
      %s270 = sphi 0, %s268
      %s271 = sphi 0, %s270
      %s285 = sphi 0, %s271
      %s289 = sphi 0, %s289
      %s291 = sphi 0, %s289
      %s292 = sphi 0, %s291
      %s306 = sphi 0, %s292
      %s310 = sphi 0, %s310
      %s312 = sphi 0, %s310
      %s313 = sphi 0, %s312
      %s327 = sphi 0, %s313
      %s333 = sphi 0, %s335
      %s336 = sphi 0, %s333
      %s337 = sphi 0, %s336
      %s353 = sphi 0, %s337
      %s359 = sphi 0, %s361
      %s362 = sphi 0, %s359
      %s363 = sphi 0, %s362
      %s379 = sphi 0, %s363
      %s389 = sphi 0, %s391
      %s392 = sphi 0, %s389
      %s393 = sphi 0, %s392
      %s409 = sphi 0, %s393
    $region4: #{backpack_content_forward.1} parent=1 // loop_header_branch
      %27 = sbr.rel (%p25) target = $region8
    $region5: #{backpack_content_forward.1} parent=1 // loop_body
      %s29 = ssub.s32 %s24, 1
      %s30 = ssub.s32 %s24, 2
      %s40 = sadd.s32 1, %s33
      %p41 = scmp.ge.s32.totalorder %s40, 4
      %s42 = scalar_select %p41, 0, %s40
      %s43 = sadd.s32 1, %s32
      %s44 = scalar_select %p41, %s43, %s32
      %p45 = scmp.ge.s32.totalorder %s44, 1
      %s46 = scalar_select %p45, 0, %s44
      %s47 = sadd.s32 1, %s31
      %s48 = scalar_select %p45, %s47, %s31
      %p49 = scmp.ge.s32.totalorder %s48, 2
      %s50 = scalar_select %p49, 0, %s48
      %s51 = ssub.s32 %s31, %s50
      %s52 = ssub.s32 %s32, %s46
      %s53 = sor.u32 %s51, %s52
      %p54 = scmp.eq.s32.totalorder %s53, 0
      %s56 = sadd.s32 %s55, 1
      %s57 = scalar_select %p54, %s55, %s56
      %p60 = pneg %p54
      %p61 = scmp.eq.s32.totalorder %s24, 7
      %p62 = por %p60, %p61
      %p63 = scmp.ne.s32.totalorder %s55, %s58
      %p64 = scmp.eq.s32.totalorder %s24, 0
      %p65 = por %p63, %p64
      %p66 = scmp.ne.s32.totalorder %s55, %s58
      %p67 = scmp.eq.s32.totalorder %s29, 7
      %p68 = por %p66, %p67
      %p69 = scmp.ne.s32.totalorder %s58, %s59
      %p70 = scmp.eq.s32.totalorder %s29, 0
      %p71 = por %p69, %p70
      %p72 = scmp.ne.s32.totalorder %s58, %s59
      %p73 = scmp.eq.s32.totalorder %s30, 7
      %p74 = por %p72, %p73
      %p76 = scmp.ne.s32.totalorder %s59, %s75
      %p77 = scmp.eq.s32.totalorder %s30, 0
      %p78 = por %p76, %p77
      %s80 = sadd.s32 %s79, 1
      %p83 = scmp.eq.s32.totalorder %s24, 7
      %p84 = scmp.ne.s32.totalorder %s79, %s81
      %p85 = scmp.eq.s32.totalorder %s24, 0
      %p86 = por %p84, %p85
      %p87 = scmp.ne.s32.totalorder %s79, %s81
      %p88 = scmp.eq.s32.totalorder %s29, 7
      %p89 = por %p87, %p88
      %p90 = scmp.ne.s32.totalorder %s81, %s82
      %p91 = scmp.eq.s32.totalorder %s29, 0
      %p92 = por %p90, %p91
      %p93 = scmp.ne.s32.totalorder %s81, %s82
      %p94 = scmp.eq.s32.totalorder %s30, 7
      %p95 = por %p93, %p94
      %p97 = scmp.ne.s32.totalorder %s82, %s96
      %p98 = scmp.eq.s32.totalorder %s30, 0
      %p99 = por %p97, %p98
      %s101 = sadd.s32 %s100, 1
      %p104 = scmp.eq.s32.totalorder %s24, 7
      %p105 = scmp.ne.s32.totalorder %s100, %s102
      %p106 = scmp.eq.s32.totalorder %s24, 0
      %p107 = por %p105, %p106
      %p108 = scmp.ne.s32.totalorder %s100, %s102
      %p109 = scmp.eq.s32.totalorder %s29, 7
      %p110 = por %p108, %p109
      %p111 = scmp.ne.s32.totalorder %s102, %s103
      %p112 = scmp.eq.s32.totalorder %s29, 0
      %p113 = por %p111, %p112
      %p114 = scmp.ne.s32.totalorder %s102, %s103
      %p115 = scmp.eq.s32.totalorder %s30, 7
      %p116 = por %p114, %p115
      %p118 = scmp.ne.s32.totalorder %s103, %s117
      %p119 = scmp.eq.s32.totalorder %s30, 0
      %p120 = por %p118, %p119
      %s122 = sadd.s32 %s121, 1
      %p125 = scmp.eq.s32.totalorder %s24, 7
      %p126 = scmp.ne.s32.totalorder %s121, %s123
      %p127 = scmp.eq.s32.totalorder %s24, 0
      %p128 = por %p126, %p127
      %p129 = scmp.ne.s32.totalorder %s121, %s123
      %p130 = scmp.eq.s32.totalorder %s29, 7
      %p131 = por %p129, %p130
      %p132 = scmp.ne.s32.totalorder %s123, %s124
      %p133 = scmp.eq.s32.totalorder %s29, 0
      %p134 = por %p132, %p133
      %p135 = scmp.ne.s32.totalorder %s123, %s124
      %p136 = scmp.eq.s32.totalorder %s30, 7
      %p137 = por %p135, %p136
      %p139 = scmp.ne.s32.totalorder %s124, %s138
      %p140 = scmp.eq.s32.totalorder %s30, 0
      %p141 = por %p139, %p140
      %s143 = sadd.s32 %s142, 1
      %p146 = scmp.eq.s32.totalorder %s24, 7
      %p147 = scmp.ne.s32.totalorder %s142, %s144
      %p148 = scmp.eq.s32.totalorder %s24, 0
      %p149 = por %p147, %p148
      %p150 = scmp.ne.s32.totalorder %s142, %s144
      %p151 = scmp.eq.s32.totalorder %s29, 7
      %p152 = por %p150, %p151
      %p153 = scmp.ne.s32.totalorder %s144, %s145
      %p154 = scmp.eq.s32.totalorder %s29, 0
      %p155 = por %p153, %p154
      %p156 = scmp.ne.s32.totalorder %s144, %s145
      %p157 = scmp.eq.s32.totalorder %s30, 7
      %p158 = por %p156, %p157
      %p160 = scmp.ne.s32.totalorder %s145, %s159
      %p161 = scmp.eq.s32.totalorder %s30, 0
      %p162 = por %p160, %p161
      %s164 = sadd.s32 %s163, 1
      %p167 = scmp.eq.s32.totalorder %s24, 7
      %p168 = scmp.ne.s32.totalorder %s163, %s165
      %p169 = scmp.eq.s32.totalorder %s24, 0
      %p170 = por %p168, %p169
      %p171 = scmp.ne.s32.totalorder %s163, %s165
      %p172 = scmp.eq.s32.totalorder %s29, 7
      %p173 = por %p171, %p172
      %p174 = scmp.ne.s32.totalorder %s165, %s166
      %p175 = scmp.eq.s32.totalorder %s29, 0
      %p176 = por %p174, %p175
      %p177 = scmp.ne.s32.totalorder %s165, %s166
      %p178 = scmp.eq.s32.totalorder %s30, 7
      %p179 = por %p177, %p178
      %p181 = scmp.ne.s32.totalorder %s166, %s180
      %p182 = scmp.eq.s32.totalorder %s30, 0
      %p183 = por %p181, %p182
      %s185 = sadd.s32 %s184, 1
      %p188 = scmp.eq.s32.totalorder %s24, 7
      %p189 = scmp.ne.s32.totalorder %s184, %s186
      %p190 = scmp.eq.s32.totalorder %s24, 0
      %p191 = por %p189, %p190
      %p192 = scmp.ne.s32.totalorder %s184, %s186
      %p193 = scmp.eq.s32.totalorder %s29, 7
      %p194 = por %p192, %p193
      %p195 = scmp.ne.s32.totalorder %s186, %s187
      %p196 = scmp.eq.s32.totalorder %s29, 0
      %p197 = por %p195, %p196
      %p198 = scmp.ne.s32.totalorder %s186, %s187
      %p199 = scmp.eq.s32.totalorder %s30, 7
      %p200 = por %p198, %p199
      %p202 = scmp.ne.s32.totalorder %s187, %s201
      %p203 = scmp.eq.s32.totalorder %s30, 0
      %p204 = por %p202, %p203
      %s206 = sadd.s32 %s205, 1
      %p209 = scmp.eq.s32.totalorder %s24, 7
      %p210 = scmp.ne.s32.totalorder %s205, %s207
      %p211 = scmp.eq.s32.totalorder %s24, 0
      %p212 = por %p210, %p211
      %p213 = scmp.ne.s32.totalorder %s205, %s207
      %p214 = scmp.eq.s32.totalorder %s29, 7
      %p215 = por %p213, %p214
      %p216 = scmp.ne.s32.totalorder %s207, %s208
      %p217 = scmp.eq.s32.totalorder %s29, 0
      %p218 = por %p216, %p217
      %p219 = scmp.ne.s32.totalorder %s207, %s208
      %p220 = scmp.eq.s32.totalorder %s30, 7
      %p221 = por %p219, %p220
      %p223 = scmp.ne.s32.totalorder %s208, %s222
      %p224 = scmp.eq.s32.totalorder %s30, 0
      %p225 = por %p223, %p224
      %s227 = sadd.s32 %s226, 1
      %p230 = scmp.eq.s32.totalorder %s24, 7
      %p231 = scmp.ne.s32.totalorder %s226, %s228
      %p232 = scmp.eq.s32.totalorder %s24, 0
      %p233 = por %p231, %p232
      %p234 = scmp.ne.s32.totalorder %s226, %s228
      %p235 = scmp.eq.s32.totalorder %s29, 7
      %p236 = por %p234, %p235
      %p237 = scmp.ne.s32.totalorder %s228, %s229
      %p238 = scmp.eq.s32.totalorder %s29, 0
      %p239 = por %p237, %p238
      %p240 = scmp.ne.s32.totalorder %s228, %s229
      %p241 = scmp.eq.s32.totalorder %s30, 7
      %p242 = por %p240, %p241
      %p244 = scmp.ne.s32.totalorder %s229, %s243
      %p245 = scmp.eq.s32.totalorder %s30, 0
      %p246 = por %p244, %p245
      %s248 = sadd.s32 %s247, 1
      %p251 = scmp.eq.s32.totalorder %s24, 7
      %p252 = scmp.ne.s32.totalorder %s247, %s249
      %p253 = scmp.eq.s32.totalorder %s24, 0
      %p254 = por %p252, %p253
      %p255 = scmp.ne.s32.totalorder %s247, %s249
      %p256 = scmp.eq.s32.totalorder %s29, 7
      %p257 = por %p255, %p256
      %p258 = scmp.ne.s32.totalorder %s249, %s250
      %p259 = scmp.eq.s32.totalorder %s29, 0
      %p260 = por %p258, %p259
      %p261 = scmp.ne.s32.totalorder %s249, %s250
      %p262 = scmp.eq.s32.totalorder %s30, 7
      %p263 = por %p261, %p262
      %p265 = scmp.ne.s32.totalorder %s250, %s264
      %p266 = scmp.eq.s32.totalorder %s30, 0
      %p267 = por %p265, %p266
      %s269 = sadd.s32 %s268, 1
      %p272 = scmp.eq.s32.totalorder %s24, 7
      %p273 = scmp.ne.s32.totalorder %s268, %s270
      %p274 = scmp.eq.s32.totalorder %s24, 0
      %p275 = por %p273, %p274
      %p276 = scmp.ne.s32.totalorder %s268, %s270
      %p277 = scmp.eq.s32.totalorder %s29, 7
      %p278 = por %p276, %p277
      %p279 = scmp.ne.s32.totalorder %s270, %s271
      %p280 = scmp.eq.s32.totalorder %s29, 0
      %p281 = por %p279, %p280
      %p282 = scmp.ne.s32.totalorder %s270, %s271
      %p283 = scmp.eq.s32.totalorder %s30, 7
      %p284 = por %p282, %p283
      %p286 = scmp.ne.s32.totalorder %s271, %s285
      %p287 = scmp.eq.s32.totalorder %s30, 0
      %p288 = por %p286, %p287
      %s290 = sadd.s32 %s289, 1
      %p293 = scmp.eq.s32.totalorder %s24, 7
      %p294 = scmp.ne.s32.totalorder %s289, %s291
      %p295 = scmp.eq.s32.totalorder %s24, 0
      %p296 = por %p294, %p295
      %p297 = scmp.ne.s32.totalorder %s289, %s291
      %p298 = scmp.eq.s32.totalorder %s29, 7
      %p299 = por %p297, %p298
      %p300 = scmp.ne.s32.totalorder %s291, %s292
      %p301 = scmp.eq.s32.totalorder %s29, 0
      %p302 = por %p300, %p301
      %p303 = scmp.ne.s32.totalorder %s291, %s292
      %p304 = scmp.eq.s32.totalorder %s30, 7
      %p305 = por %p303, %p304
      %p307 = scmp.ne.s32.totalorder %s292, %s306
      %p308 = scmp.eq.s32.totalorder %s30, 0
      %p309 = por %p307, %p308
      %s311 = sadd.s32 %s310, 1
      %p314 = scmp.eq.s32.totalorder %s24, 7
      %p315 = scmp.ne.s32.totalorder %s310, %s312
      %p316 = scmp.eq.s32.totalorder %s24, 0
      %p317 = por %p315, %p316
      %p318 = scmp.ne.s32.totalorder %s310, %s312
      %p319 = scmp.eq.s32.totalorder %s29, 7
      %p320 = por %p318, %p319
      %p321 = scmp.ne.s32.totalorder %s312, %s313
      %p322 = scmp.eq.s32.totalorder %s29, 0
      %p323 = por %p321, %p322
      %p324 = scmp.ne.s32.totalorder %s312, %s313
      %p325 = scmp.eq.s32.totalorder %s30, 7
      %p326 = por %p324, %p325
      %p328 = scmp.ne.s32.totalorder %s313, %s327
      %p329 = scmp.eq.s32.totalorder %s30, 0
      %p330 = por %p328, %p329
      %s331 = ssub.s32 %s33, %s42
      %p332 = scmp.eq.s32.totalorder %s331, 0
      %s334 = sadd.s32 %s333, 1
      %s335 = scalar_select %p332, %s333, %s334
      %p338 = pneg %p332
      %p339 = scmp.eq.s32.totalorder %s24, 7
      %p340 = por %p338, %p339
      %p341 = scmp.ne.s32.totalorder %s333, %s336
      %p342 = scmp.eq.s32.totalorder %s24, 0
      %p343 = por %p341, %p342
      %p344 = scmp.ne.s32.totalorder %s333, %s336
      %p345 = scmp.eq.s32.totalorder %s29, 7
      %p346 = por %p344, %p345
      %p347 = scmp.ne.s32.totalorder %s336, %s337
      %p348 = scmp.eq.s32.totalorder %s29, 0
      %p349 = por %p347, %p348
      %p350 = scmp.ne.s32.totalorder %s336, %s337
      %p351 = scmp.eq.s32.totalorder %s30, 7
      %p352 = por %p350, %p351
      %p354 = scmp.ne.s32.totalorder %s337, %s353
      %p355 = scmp.eq.s32.totalorder %s30, 0
      %p356 = por %p354, %p355
      %s357 = ssub.s32 %s33, %s42
      %p358 = scmp.eq.s32.totalorder %s357, 0
      %s360 = sadd.s32 %s359, 1
      %s361 = scalar_select %p358, %s359, %s360
      %p364 = pneg %p358
      %p365 = scmp.eq.s32.totalorder %s24, 7
      %p366 = por %p364, %p365
      %p367 = scmp.ne.s32.totalorder %s359, %s362
      %p368 = scmp.eq.s32.totalorder %s24, 0
      %p369 = por %p367, %p368
      %p370 = scmp.ne.s32.totalorder %s359, %s362
      %p371 = scmp.eq.s32.totalorder %s29, 7
      %p372 = por %p370, %p371
      %p373 = scmp.ne.s32.totalorder %s362, %s363
      %p374 = scmp.eq.s32.totalorder %s29, 0
      %p375 = por %p373, %p374
      %p376 = scmp.ne.s32.totalorder %s362, %s363
      %p377 = scmp.eq.s32.totalorder %s30, 7
      %p378 = por %p376, %p377
      %p380 = scmp.ne.s32.totalorder %s363, %s379
      %p381 = scmp.eq.s32.totalorder %s30, 0
      %p382 = por %p380, %p381
      %s383 = ssub.s32 %s31, %s50
      %s384 = ssub.s32 %s33, %s42
      %s385 = sor.u32 %s383, %s384
      %s386 = ssub.s32 %s32, %s46
      %s387 = sor.u32 %s385, %s386
      %p388 = scmp.eq.s32.totalorder %s387, 0
      %s390 = sadd.s32 %s389, 1
      %s391 = scalar_select %p388, %s389, %s390
      %p394 = pneg %p388
      %p395 = scmp.eq.s32.totalorder %s24, 7
      %p396 = por %p394, %p395
      %p397 = scmp.ne.s32.totalorder %s389, %s392
      %p398 = scmp.eq.s32.totalorder %s24, 0
      %p399 = por %p397, %p398
      %p400 = scmp.ne.s32.totalorder %s389, %s392
      %p401 = scmp.eq.s32.totalorder %s29, 7
      %p402 = por %p400, %p401
      %p403 = scmp.ne.s32.totalorder %s392, %s393
      %p404 = scmp.eq.s32.totalorder %s29, 0
      %p405 = por %p403, %p404
      %p406 = scmp.ne.s32.totalorder %s392, %s393
      %p407 = scmp.eq.s32.totalorder %s30, 7
      %p408 = por %p406, %p407
      %p410 = scmp.ne.s32.totalorder %s393, %s409
      %p411 = scmp.eq.s32.totalorder %s30, 0
      %p412 = por %p410, %p411
      %p413 = scmp.le.s32.totalorder 1, %s24
      %p414 = scmp.lt.s32.totalorder %s24, 9
      %p415 = pnand %p413, %p414
      %p416 = pneg %p415
      // Predicated region
      $region9: #{backpack_content_forward.1} parent=5 // pred_check
        _
      $region10: #{backpack_content_forward.1} parent=5 // pred_check_branch
        %418 = sbr.rel (%p415) target = $region12
      $region11: #{backpack_content_forward.1} parent=5 // pred_region
        %s419 = ssub.s32 %s24, 1
        // Predicated region
        $region13: #{backpack_content_forward.1} parent=11 // pred_check
          %p420 = pneg %p92
        $region14: #{backpack_content_forward.1} parent=11 // pred_check_branch
          %422 = sbr.rel (%p420) target = $region16
        $region15: #{backpack_content_forward.1} parent=11 // pred_region
          _
        $region16: #{backpack_content_forward.1} parent=11 // pred_fallthru
          _
        // Predicated region
        $region17: #{backpack_content_forward.1} parent=11 // pred_check
          %p423 = pneg %p113
        $region18: #{backpack_content_forward.1} parent=11 // pred_check_branch
          %425 = sbr.rel (%p423) target = $region20
        $region19: #{backpack_content_forward.1} parent=11 // pred_region
          _
        $region20: #{backpack_content_forward.1} parent=11 // pred_fallthru
          _
        // Predicated region
        $region21: #{backpack_content_forward.1} parent=11 // pred_check
          %p426 = pneg %p134
        $region22: #{backpack_content_forward.1} parent=11 // pred_check_branch
          %428 = sbr.rel (%p426) target = $region24
        $region23: #{backpack_content_forward.1} parent=11 // pred_region
          _
        $region24: #{backpack_content_forward.1} parent=11 // pred_fallthru
          _
        // Predicated region
        $region25: #{backpack_content_forward.1} parent=11 // pred_check
          %p429 = pneg %p155
        $region26: #{backpack_content_forward.1} parent=11 // pred_check_branch
          %431 = sbr.rel (%p429) target = $region28
        $region27: #{backpack_content_forward.1} parent=11 // pred_region
          _
        $region28: #{backpack_content_forward.1} parent=11 // pred_fallthru
          _
        // Predicated region
        $region29: #{backpack_content_forward.1} parent=11 // pred_check
          %p432 = pneg %p176
        $region30: #{backpack_content_forward.1} parent=11 // pred_check_branch
          %434 = sbr.rel (%p432) target = $region32
        $region31: #{backpack_content_forward.1} parent=11 // pred_region
          _
        $region32: #{backpack_content_forward.1} parent=11 // pred_fallthru
          _
        // Predicated region
        $region33: #{backpack_content_forward.1} parent=11 // pred_check
          %p435 = pneg %p197
        $region34: #{backpack_content_forward.1} parent=11 // pred_check_branch
          %437 = sbr.rel (%p435) target = $region36
        $region35: #{backpack_content_forward.1} parent=11 // pred_region
          _
        $region36: #{backpack_content_forward.1} parent=11 // pred_fallthru
          _
        // Predicated region
        $region37: #{backpack_content_forward.1} parent=11 // pred_check
          %p438 = pneg %p218
        $region38: #{backpack_content_forward.1} parent=11 // pred_check_branch
          %440 = sbr.rel (%p438) target = $region40
        $region39: #{backpack_content_forward.1} parent=11 // pred_region
          _
        $region40: #{backpack_content_forward.1} parent=11 // pred_fallthru
          _
        // Predicated region
        $region41: #{backpack_content_forward.1} parent=11 // pred_check
          %p441 = pneg %p239
        $region42: #{backpack_content_forward.1} parent=11 // pred_check_branch
          %443 = sbr.rel (%p441) target = $region44
        $region43: #{backpack_content_forward.1} parent=11 // pred_region
          _
        $region44: #{backpack_content_forward.1} parent=11 // pred_fallthru
          _
        // Predicated region
        $region45: #{backpack_content_forward.1} parent=11 // pred_check
          %p444 = pneg %p260
        $region46: #{backpack_content_forward.1} parent=11 // pred_check_branch
          %446 = sbr.rel (%p444) target = $region48
        $region47: #{backpack_content_forward.1} parent=11 // pred_region
          _
        $region48: #{backpack_content_forward.1} parent=11 // pred_fallthru
          _
        // Predicated region
        $region49: #{backpack_content_forward.1} parent=11 // pred_check
          %p447 = pneg %p281
        $region50: #{backpack_content_forward.1} parent=11 // pred_check_branch
          %449 = sbr.rel (%p447) target = $region52
        $region51: #{backpack_content_forward.1} parent=11 // pred_region
          _
        $region52: #{backpack_content_forward.1} parent=11 // pred_fallthru
          _
        // Predicated region
        $region53: #{backpack_content_forward.1} parent=11 // pred_check
          %p450 = pneg %p302
        $region54: #{backpack_content_forward.1} parent=11 // pred_check_branch
          %452 = sbr.rel (%p450) target = $region56
        $region55: #{backpack_content_forward.1} parent=11 // pred_region
          _
        $region56: #{backpack_content_forward.1} parent=11 // pred_fallthru
          _
        // Predicated region
        $region57: #{backpack_content_forward.1} parent=11 // pred_check
          %p453 = pneg %p323
        $region58: #{backpack_content_forward.1} parent=11 // pred_check_branch
          %455 = sbr.rel (%p453) target = $region60
        $region59: #{backpack_content_forward.1} parent=11 // pred_region
          _
        $region60: #{backpack_content_forward.1} parent=11 // pred_fallthru
          _
      $region12: #{backpack_content_forward.1} parent=5 // pred_fallthru
        _
      %p456 = scmp.lt.s32.totalorder %s24, 8
      // Predicated region
      $region61: #{backpack_content_forward.1} parent=5 // pred_check
        %p457 = pneg %p456
      $region62: #{backpack_content_forward.1} parent=5 // pred_check_branch
        %459 = sbr.rel (%p457) target = $region64
      $region63: #{backpack_content_forward.1} parent=5 // pred_region
        // Predicated region
        $region65: #{backpack_content_forward.1} parent=63 // pred_check
          %p460 = pneg %p65
        $region66: #{backpack_content_forward.1} parent=63 // pred_check_branch
          %462 = sbr.rel (%p460) target = $region68
        $region67: #{backpack_content_forward.1} parent=63 // pred_region
          %p463 = scmp.lt.s32.totalorder %s31, 1
          %s464 = scalar_select %p463, %s31, 1
          %p465 = scmp.lt.s32.totalorder %s32, 0
          %s466 = scalar_select %p465, %s32, 0
          %s467 = sadd.s32 %s466, %s464
          %s468 = smul.addr %s467, 8
          %s469 = scalar_lea.vmem %s0, %s468
        $region68: #{backpack_content_forward.1} parent=63 // pred_fallthru
          _
        // Predicated region
        $region69: #{backpack_content_forward.1} parent=63 // pred_check
          %p470 = pneg %p343
        $region70: #{backpack_content_forward.1} parent=63 // pred_check_branch
          %472 = sbr.rel (%p470) target = $region72
        $region71: #{backpack_content_forward.1} parent=63 // pred_region
          %p473 = scmp.lt.s32.totalorder %s33, 3
          %s474 = scalar_select %p473, %s33, 3
          %s475 = smul.addr %s474, 16
          %s476 = smul.addr %s475, 8
          %s477 = scalar_lea.vmem %s13, %s476
        $region72: #{backpack_content_forward.1} parent=63 // pred_fallthru
          _
        // Predicated region
        $region73: #{backpack_content_forward.1} parent=63 // pred_check
          %p478 = pneg %p369
        $region74: #{backpack_content_forward.1} parent=63 // pred_check_branch
          %480 = sbr.rel (%p478) target = $region76
        $region75: #{backpack_content_forward.1} parent=63 // pred_region
          %p481 = scmp.lt.s32.totalorder %s33, 3
          %s482 = scalar_select %p481, %s33, 3
          %s483 = scalar_lea.vmem %s14, %s482
        $region76: #{backpack_content_forward.1} parent=63 // pred_fallthru
          _
      $region64: #{backpack_content_forward.1} parent=5 // pred_fallthru
        _
      %p484 = scmp.le.s32.totalorder 1, %s24
      %p485 = scmp.lt.s32.totalorder %s24, 9
      %p486 = pnand %p484, %p485
      %p487 = pneg %p486
      // Predicated region
      $region77: #{backpack_content_forward.1} parent=5 // pred_check
        _
      $region78: #{backpack_content_forward.1} parent=5 // pred_check_branch
        %489 = sbr.rel (%p486) target = $region80
      $region79: #{backpack_content_forward.1} parent=5 // pred_region
        %s490 = ssub.s32 %s24, 1
        %p491 = scmp.lt.s32.totalorder %s34, 1
        %s492 = scalar_select %p491, %s34, 1
        %p493 = scmp.lt.s32.totalorder %s35, 0
        %s494 = scalar_select %p493, %s35, 0
        %s495 = sadd.s32 %s494, %s492
        %s496 = smul.addr %s495, 8
        %s497 = scalar_lea.vmem %s0, %s496
        %p498 = pneg %p71
        %p499 = pneg %p68
        %p500 = pneg %p92
        %p501 = pneg %p89
        %p502 = pneg %p113
        %p503 = pneg %p110
        %p504 = pneg %p134
        %p505 = pneg %p131
        %p506 = pneg %p155
        %p507 = pneg %p152
        %p508 = pneg %p176
        %p509 = pneg %p173
        %p510 = pneg %p197
        %p511 = pneg %p194
        %p512 = pneg %p218
        %p513 = pneg %p215
        %p514 = pneg %p239
        %p515 = pneg %p236
        %p516 = pneg %p260
        %p517 = pneg %p257
        %p518 = pneg %p281
        %p519 = pneg %p278
        %p520 = pneg %p302
        %p521 = pneg %p299
        %p522 = pneg %p323
        %p523 = pneg %p320
        %p524 = scmp.lt.s32.totalorder %s36, 3
        %s525 = scalar_select %p524, %s36, 3
        %s526 = smul.addr %s525, 16
        %s527 = smul.addr %s526, 8
        %s528 = scalar_lea.vmem %s13, %s527
        %p529 = pneg %p349
        %p530 = pneg %p346
        %p531 = scmp.lt.s32.totalorder %s36, 3
        %s532 = scalar_select %p531, %s36, 3
        %s533 = scalar_lea.vmem %s14, %s532
        %p534 = pneg %p375
        %p535 = pneg %p372
        %p536 = pneg %p405
        %p537 = pneg %p402
        %s538 = sand.u32 %s392, 1
        %s539 = scalar_lea.sflag [#allocation4], %s538
        %s540 = sand.u32 %s392, 1
        %s541 = smul.addr %s540, 8
        %s542 = scalar_lea.vmem [#allocation3], %s541
        %p543 = scmp.lt.s32.totalorder %s34, 1
        %s544 = scalar_select %p543, %s34, 1
        %p545 = scmp.lt.s32.totalorder %s35, 0
        %s546 = scalar_select %p545, %s35, 0
        %s547 = sadd.s32 %s546, %s544
        %s548 = smul.addr %s547, 8
        %s549 = scalar_lea.vmem %s0, %s548
        %p550 = scmp.lt.s32.totalorder %s36, 3
        %s551 = scalar_select %p550, %s36, 3
        %s552 = smul.addr %s551, 16
        %s553 = smul.addr %s552, 8
        %s554 = scalar_lea.vmem %s13, %s553
        %p555 = scmp.lt.s32.totalorder %s36, 3
        %s556 = scalar_select %p555, %s36, 3
        %s557 = scalar_lea.vmem %s14, %s556
        %p558 = scmp.eq.s32.totalorder %s36, 0
        // Predicated region
        $region81: #{backpack_content_forward.1} parent=79 // pred_check
          %p559 = pneg %p558
        $region82: #{backpack_content_forward.1} parent=79 // pred_check_branch
          %561 = sbr.rel (%p559) target = $region84
        $region83: #{backpack_content_forward.1} parent=79 // pred_region
          %v562 = vld [vmem:[%s549] sm:$0xff]
          %v563 = vld [vmem:[%s1] sm:$0x1]
          %v564 = vld [vmem:[%s2] sm:$0x1]
          %vm565 = vcmask 261120
          %v566 = vsel %vm565, %v562, 0.0
          %567 = vadd.xlane.f32.xlu0 %v566
          %v568 = vpop.xlane.xlu0 %567
          %v569 = vrcp.pop 32.0
          %v570 = vmul.f32 32.0, %v569
          %v571 = vsub.f32 1.0, %v570
          %v572 = vmul.f32 %v569, %v571
          %v573 = vadd.f32 %v569, %v572
          %vm574 = vweird.f32 %v569
          %v575 = vsel %vm574, %v569, %v573
          %v576 = vmul.f32 %v568, %v575
          %v577 = vmul.f32 %v562, %v562
          %v578 = vsel %vm565, %v577, 0.0
          %579 = vadd.xlane.f32.xlu0 %v578
          %v580 = vpop.xlane.xlu0 %579
          %v581 = vmul.f32 %v580, %v575
          %v582 = vmul.f32 %v576, %v576
          %v583 = vsub.f32 %v581, %v582
          %v584 = vadd.f32 %v583, 1e-05
          %v585 = vrsqrt.pop %v584
          %v586 = vmul.f32 %v585, %v584
          %v587 = vmul.f32 %v586, %v585
          %v588 = vmul.f32 0.5, %v587
          %v589 = vsub.f32 1.5, %v588
          %v590 = vmul.f32 %v585, %v589
          %vm591 = vweird.f32 %v584
          %vm592 = vweird.f32 %v585
          %vm593 = vmor %vm591, %vm592
          %v594 = vsel %vm593, %v585, %v590
          %v595 = vsub.f32 %v562, %v576
          %v596 = vmul.f32 %v595, %v594
          %v598 = vperm.slane %v563, 0
          %v600 = vmul.f32 %v596, %v598
          %v602 = vperm.slane %v564, 0
          %v604 = vadd.f32 %v600, %v602
          %v605 = vadd.f32 %v604, %v562
          %v606 = vld [vmem:[%s3] sm:$0x1]
          %v607 = vld [vmem:[%s4] sm:$0x1]
          %v608 = vsel %vm565, %v605, 0.0
          %609 = vadd.xlane.f32.xlu0 %v608
          %v610 = vpop.xlane.xlu0 %609
          %v611 = vmul.f32 %v610, %v575
          %v612 = vmul.f32 %v605, %v605
          %v613 = vsel %vm565, %v612, 0.0
          %614 = vadd.xlane.f32.xlu0 %v613
          %v615 = vpop.xlane.xlu0 %614
          %v616 = vmul.f32 %v615, %v575
          %v617 = vmul.f32 %v611, %v611
          %v618 = vsub.f32 %v616, %v617
          %v619 = vadd.f32 %v618, 1e-05
          %v620 = vrsqrt.pop %v619
          %v621 = vmul.f32 %v620, %v619
          %v622 = vmul.f32 %v621, %v620
          %v623 = vmul.f32 0.5, %v622
          %v624 = vsub.f32 1.5, %v623
          %v625 = vmul.f32 %v620, %v624
          %vm626 = vweird.f32 %v619
          %vm627 = vweird.f32 %v620
          %vm628 = vmor %vm626, %vm627
          %v629 = vsel %vm628, %v620, %v625
          %v630 = vsub.f32 %v605, %v611
          %v631 = vmul.f32 %v630, %v629
          %v633 = vperm.slane %v606, 0
          %v635 = vmul.f32 %v631, %v633
          %v637 = vperm.slane %v607, 0
          %v639 = vadd.f32 %v635, %v637
          %v640 = vadd.f32 %v639, %v605
          %v641 = vld [vmem:[%s5] sm:$0x1]
          %v642 = vld [vmem:[%s6] sm:$0x1]
          %v643 = vsel %vm565, %v640, 0.0
          %644 = vadd.xlane.f32.xlu0 %v643
          %v645 = vpop.xlane.xlu0 %644
          %v646 = vmul.f32 %v645, %v575
          %v647 = vmul.f32 %v640, %v640
          %v648 = vsel %vm565, %v647, 0.0
          %649 = vadd.xlane.f32.xlu0 %v648
          %v650 = vpop.xlane.xlu0 %649
          %v651 = vmul.f32 %v650, %v575
          %v652 = vmul.f32 %v646, %v646
          %v653 = vsub.f32 %v651, %v652
          %v654 = vadd.f32 %v653, 1e-05
          %v655 = vrsqrt.pop %v654
          %v656 = vmul.f32 %v655, %v654
          %v657 = vmul.f32 %v656, %v655
          %v658 = vmul.f32 0.5, %v657
          %v659 = vsub.f32 1.5, %v658
          %v660 = vmul.f32 %v655, %v659
          %vm661 = vweird.f32 %v654
          %vm662 = vweird.f32 %v655
          %vm663 = vmor %vm661, %vm662
          %v664 = vsel %vm663, %v655, %v660
          %v665 = vsub.f32 %v640, %v646
          %v666 = vmul.f32 %v665, %v664
          %v668 = vperm.slane %v641, 0
          %v670 = vmul.f32 %v666, %v668
          %v672 = vperm.slane %v642, 0
          %v674 = vadd.f32 %v670, %v672
          %v675 = vld [vmem:[%s7] sm:$0xff]
          %v676 = vld [vmem:[%s7 + $0x8] sm:$0xff]
          %v677 = vld [vmem:[%s7 + $0x10] sm:$0xff]
          %v678 = vld [vmem:[%s7 + $0x18] sm:$0xff]
          %v679 = vld [vmem:[%s8] sm:$0x1]
          %v681 = vperm.slane %v679, 0
          %v684 = vsel %vm565, %v674, 0
          %686 = vmatpush.msra.mxu0 0.0
          %687 = vmatpush.msra.mxu0 0.0
          %688 = vmatpush.msra.mxu0 0.0
          %689 = vmatpush.msra.mxu0 0.0
          %690 = vmatpush.msra.mxu0 0.0
          %691 = vmatpush.msra.mxu0 0.0
          %692 = vmatpush.msra.mxu0 0.0
          %693 = vmatpush.msra.mxu0 0.0
          %694 = vmatpush.msra.mxu0 0.0
          %695 = vmatpush.msra.mxu0 0.0
          %696 = vmatpush.msra.mxu0 0.0
          %697 = vmatpush.msra.mxu0 0.0
          %698 = vmatpush.msra.mxu0 %v678
          %699 = vmatpush.msra.mxu0 %v677
          %700 = vmatpush.msra.mxu0 %v676
          %701 = vmatpush.msra.mxu0 %v675
          %702 = vmatmul.f32.gmra.mxu0 %v684
          %v703 = vpop.f32.mrf.mxu0
          %v704 = vadd.f32 %v681, %v703
          %705 = vdwg.mxu0
          %v706 = vmul.f32 %v704, 0.5
          %v707 = vmul.f32 %v704, 0.044715
          %v708 = vmul.f32 %v707, %v704
          %v709 = vmul.f32 %v708, %v704
          %v710 = vadd.f32 %v704, %v709
          %v711 = vmul.f32 %v710, 0.7978846
          %v712 = vtanh.pop %v711
          %v713 = vadd.f32 %v712, 1.0
          %v714 = vmul.f32 %v706, %v713
          %v715 = vld [vmem:[%s9] sm:$0xff]
          %v716 = vld [vmem:[%s9 + $0x8] sm:$0xff]
          %v717 = vld [vmem:[%s9 + $0x10] sm:$0xff]
          %v718 = vld [vmem:[%s9 + $0x18] sm:$0xff]
          %v719 = vld [vmem:[%s9 + $0x20] sm:$0xff]
          %v720 = vld [vmem:[%s9 + $0x28] sm:$0xff]
          %v721 = vld [vmem:[%s9 + $0x30] sm:$0xff]
          %v722 = vld [vmem:[%s9 + $0x38] sm:$0xff]
          %v723 = vld [vmem:[%s9 + $0x40] sm:$0xff]
          %v724 = vld [vmem:[%s9 + $0x48] sm:$0xff]
          %v725 = vld [vmem:[%s9 + $0x50] sm:$0xff]
          %v726 = vld [vmem:[%s9 + $0x58] sm:$0xff]
          %v727 = vld [vmem:[%s9 + $0x60] sm:$0xff]
          %v728 = vld [vmem:[%s9 + $0x68] sm:$0xff]
          %v729 = vld [vmem:[%s9 + $0x70] sm:$0xff]
          %v730 = vld [vmem:[%s9 + $0x78] sm:$0xff]
          %v731 = vld [vmem:[%s10] sm:$0x1]
          %v733 = vperm.slane %v731, 0
          %735 = vmatpush.msra.mxu0 %v730
          %736 = vmatpush.msra.mxu0 %v729
          %737 = vmatpush.msra.mxu0 %v728
          %738 = vmatpush.msra.mxu0 %v727
          %739 = vmatpush.msra.mxu0 %v726
          %740 = vmatpush.msra.mxu0 %v725
          %741 = vmatpush.msra.mxu0 %v724
          %742 = vmatpush.msra.mxu0 %v723
          %743 = vmatpush.msra.mxu0 %v722
          %744 = vmatpush.msra.mxu0 %v721
          %745 = vmatpush.msra.mxu0 %v720
          %746 = vmatpush.msra.mxu0 %v719
          %747 = vmatpush.msra.mxu0 %v718
          %748 = vmatpush.msra.mxu0 %v717
          %749 = vmatpush.msra.mxu0 %v716
          %750 = vmatpush.msra.mxu0 %v715
          %751 = vmatmul.f32.gmra.mxu0 %v714
          %v752 = vpop.f32.mrf.mxu0
          %v753 = vadd.f32 %v733, %v752
          %754 = vdwg.mxu0
          %v755 = vld [vmem:[%s11] sm:$0xff]
          %v756 = vld [vmem:[%s11 + $0x8] sm:$0xff]
          %v757 = vld [vmem:[%s11 + $0x10] sm:$0xff]
          %v758 = vld [vmem:[%s11 + $0x18] sm:$0xff]
          %v759 = vld [vmem:[%s12] sm:$0x1]
          %v761 = vperm.slane %v759, 0
          %v764 = vsel %vm565, %v753, 0
          %766 = vmatpush.msra.mxu0 0.0
          %767 = vmatpush.msra.mxu0 0.0
          %768 = vmatpush.msra.mxu0 0.0
          %769 = vmatpush.msra.mxu0 0.0
          %770 = vmatpush.msra.mxu0 0.0
          %771 = vmatpush.msra.mxu0 0.0
          %772 = vmatpush.msra.mxu0 0.0
          %773 = vmatpush.msra.mxu0 0.0
          %774 = vmatpush.msra.mxu0 0.0
          %775 = vmatpush.msra.mxu0 0.0
          %776 = vmatpush.msra.mxu0 0.0
          %777 = vmatpush.msra.mxu0 0.0
          %778 = vmatpush.msra.mxu0 %v758
          %779 = vmatpush.msra.mxu0 %v757
          %780 = vmatpush.msra.mxu0 %v756
          %781 = vmatpush.msra.mxu0 %v755
          %782 = vmatmul.f32.gmra.mxu0 %v764
          %v783 = vpop.f32.mrf.mxu0
          %v784 = vadd.f32 %v761, %v783
          %785 = vdwg.mxu0
          %v786 = vmul.f32 %v784, 0.5
          %v787 = vmul.f32 %v784, 0.044715
          %v788 = vmul.f32 %v787, %v784
          %v789 = vmul.f32 %v788, %v784
          %v790 = vadd.f32 %v784, %v789
          %v791 = vmul.f32 %v790, 0.7978846
          %v792 = vtanh.pop %v791
          %v793 = vadd.f32 %v792, 1.0
          %v794 = vmul.f32 %v786, %v793
          %795 = vst [vmem:[#allocation2] sm:$0xff] %v794
        $region84: #{backpack_content_forward.1} parent=79 // pred_fallthru
          _
        %v796 = vld [vmem:[#allocation2] sm:$0xff]
        %v797 = vld [vmem:[%s554] sm:$0xff]
        %v798 = vld [vmem:[%s554 + $0x8] sm:$0xff]
        %v799 = vld [vmem:[%s554 + $0x10] sm:$0xff]
        %v800 = vld [vmem:[%s554 + $0x18] sm:$0xff]
        %v801 = vld [vmem:[%s554 + $0x20] sm:$0xff]
        %v802 = vld [vmem:[%s554 + $0x28] sm:$0xff]
        %v803 = vld [vmem:[%s554 + $0x30] sm:$0xff]
        %v804 = vld [vmem:[%s554 + $0x38] sm:$0xff]
        %v805 = vld [vmem:[%s554 + $0x40] sm:$0xff]
        %v806 = vld [vmem:[%s554 + $0x48] sm:$0xff]
        %v807 = vld [vmem:[%s554 + $0x50] sm:$0xff]
        %v808 = vld [vmem:[%s554 + $0x58] sm:$0xff]
        %v809 = vld [vmem:[%s554 + $0x60] sm:$0xff]
        %v810 = vld [vmem:[%s554 + $0x68] sm:$0xff]
        %v811 = vld [vmem:[%s554 + $0x70] sm:$0xff]
        %v812 = vld [vmem:[%s554 + $0x78] sm:$0xff]
        %v813 = vld [vmem:[%s557] sm:$0x1]
        %v815 = vperm.slane %v813, 0
        %817 = vmatpush.msra.mxu0 %v812
        %818 = vmatpush.msra.mxu0 %v811
        %819 = vmatpush.msra.mxu0 %v810
        %820 = vmatpush.msra.mxu0 %v809
        %821 = vmatpush.msra.mxu0 %v808
        %822 = vmatpush.msra.mxu0 %v807
        %823 = vmatpush.msra.mxu0 %v806
        %824 = vmatpush.msra.mxu0 %v805
        %825 = vmatpush.msra.mxu0 %v804
        %826 = vmatpush.msra.mxu0 %v803
        %827 = vmatpush.msra.mxu0 %v802
        %828 = vmatpush.msra.mxu0 %v801
        %829 = vmatpush.msra.mxu0 %v800
        %830 = vmatpush.msra.mxu0 %v799
        %831 = vmatpush.msra.mxu0 %v798
        %832 = vmatpush.msra.mxu0 %v797
        %833 = vmatmul.f32.gmra.mxu0 %v796
        %v834 = vpop.f32.mrf.mxu0
        %v835 = vadd.f32 %v815, %v834
        %836 = vdwg.mxu0
        %vm837 = vcmask 261120
        %838 = vst.msk [vmem:[%s542] sm:$0xff] %vm837, %v835
        %s839 = sand.u32 %s392, 1
        %s840 = scalar_lea.sflag [#allocation4], %s839
        %s841 = sand.u32 %s392, 1
        %s842 = smul.addr %s841, 8
        %s843 = scalar_lea.vmem [#allocation3], %s842
        // Predicated region
        $region85: #{backpack_content_forward.1} parent=79 // pred_check
          %p844 = pneg %p402
        $region86: #{backpack_content_forward.1} parent=79 // pred_check_branch
          %846 = sbr.rel (%p844) target = $region88
        $region87: #{backpack_content_forward.1} parent=79 // pred_region
          %848 = vsyncadd %s840, 0
          %s849 = sadd.s32 %s35, %s36
          %s850 = smul.addr %s34, 4
          %s851 = sadd.s32 %s849, %s850
          %s852 = smul.addr %s851, 8
          %s853 = scalar_lea.hbm %s15, %s852
          %s855 = sshll.u32 %s843, 4
          %s856 = int_to_ptr.vmem [resolvable:$true] %s855
          %s857 = sshll.u32 %s853, 4
          %s858 = int_to_ptr.hbm [resolvable:$true] %s857
          %860 = dma.vmem_to_hbm [thread:$0]  %s856, 128, %s858, %s840
        $region88: #{backpack_content_forward.1} parent=79 // pred_fallthru
          _
      $region80: #{backpack_content_forward.1} parent=5 // pred_fallthru
        _
      %p861 = scmp.le.s32.totalorder 2, %s24
      // Predicated region
      $region89: #{backpack_content_forward.1} parent=5 // pred_check
        %p862 = pneg %p861
      $region90: #{backpack_content_forward.1} parent=5 // pred_check_branch
        %864 = sbr.rel (%p862) target = $region92
      $region91: #{backpack_content_forward.1} parent=5 // pred_region
        %s865 = ssub.s32 %s24, 2
        // Predicated region
        $region93: #{backpack_content_forward.1} parent=91 // pred_check
          %p866 = pneg %p408
        $region94: #{backpack_content_forward.1} parent=91 // pred_check_branch
          %868 = sbr.rel (%p866) target = $region96
        $region95: #{backpack_content_forward.1} parent=91 // pred_region
          %s869 = sand.u32 %s393, 1
          %s870 = scalar_lea.sflag [#allocation4], %s869
          %s871 = sand.u32 %s393, 1
          %s872 = smul.addr %s871, 8
          %s873 = scalar_lea.vmem [#allocation3], %s872
          %875 = dma.done %s870, 128
        $region96: #{backpack_content_forward.1} parent=91 // pred_fallthru
          _
      $region92: #{backpack_content_forward.1} parent=5 // pred_fallthru
        _
    $region6: #{backpack_content_forward.1} parent=1 // loop_footer
      %s28 = sadd.s32 1, %s24
    $region7: #{backpack_content_forward.1} parent=1 // loop_footer_branch
      %23 = sbr.rel target = $region3
    $region8: #{backpack_content_forward.1} parent=1 // loop_exit
      _
    %876 = vsyncpa [#allocation4], 1
    %s877 = scalar_lea.sflag [#allocation4], 1
    %878 = vsyncpa %s877, 1

</llo_original>
